<compile_context>
chip_gen: v6e
topology: v6e:2x2x1
jax: 0.10.0
libtpu: 0.0.40
codegen_flags: <defaults>
</compile_context>

<pallas_src>
import math

import jax
import jax.numpy as jnp
from jax import lax
from jax.experimental import pallas as pl
from jax.experimental.pallas import tpu as pltpu

_TRANS_B = (((1,), (1,)), ((), ()))  # contract dim 1 of lhs with dim 1 of rhs
_INV_SQRT2 = 0.7071067811865476
_LN_EPS = 1e-12


def _mlm_head_kernel(x_ref, wd_ref, bd_ref, g_ref, be_ref, wv_ref, bv_ref,
                     o_ref, t_ref):
    # x_ref : (TM, H)   input rows tile (native dtype -> MXU)
    # wd_ref: (H, H)    dense weight, PyTorch (out, in) layout (no transpose)
    # bd_ref: (1, H)    dense bias
    # g_ref : (1, H)    LayerNorm gamma
    # be_ref: (1, H)    LayerNorm beta
    # wv_ref: (TV, H)   decoder (embedding) weight tile, (vocab, in) layout
    # bv_ref: (1, TV)   decoder bias tile
    # o_ref : (TM, TV)  output logits tile
    # t_ref : (TM, H)   scratch: transformed activations, persists across j
    j = pl.program_id(1)

    @pl.when(j == 0)
    def _transform():
        # Dense: x @ Wd^T + bd  (MXU handles the transposed contraction)
        h = lax.dot_general(x_ref[...], wd_ref[...], _TRANS_B,
                            preferred_element_type=jnp.float32)
        h = h + bd_ref[...].astype(jnp.float32)

        # GELU (erf variant, matches the PyTorch reference)
        h = h * 0.5 * (1.0 + lax.erf(h * _INV_SQRT2))

        # BertLayerNorm (TF style, eps inside rsqrt), reduced over hidden dim
        inv_h = 1.0 / h.shape[-1]
        u = jnp.sum(h, axis=-1, keepdims=True) * inv_h
        d = h - u
        s = jnp.sum(d * d, axis=-1, keepdims=True) * inv_h
        h = d * lax.rsqrt(s + _LN_EPS)
        h = g_ref[...].astype(jnp.float32) * h + be_ref[...].astype(jnp.float32)

        t_ref[...] = h.astype(t_ref.dtype)

    # Decoder: transformed @ Wdec^T + bias for this vocab tile
    logits = lax.dot_general(t_ref[...], wv_ref[...], _TRANS_B,
                             preferred_element_type=jnp.float32)
    logits = logits + bv_ref[...].astype(jnp.float32)
    o_ref[...] = logits.astype(o_ref.dtype)


def _round_up(x, m):
    return (x + m - 1) // m * m


def bert_only_mlm_head(sequence_output, dense_w, dense_b, ln_gamma, ln_beta,
                       decoder_w, decoder_b, *, tm=256, tv=512,
                       vmem_limit_bytes=48 * 1024 * 1024):
    """sequence_output: [B, S, H]; dense_w: [H, H] (out, in);
    decoder_w: [V, H] (embedding matrix); returns [B, S, V]."""
    B, S, H = sequence_output.shape
    V = decoder_w.shape[0]
    M = B * S

    x2d = sequence_output.reshape(M, H)

    # Effective tiles: clamp to the (padded) problem, keep (8, 128) alignment.
    tm_eff = min(_round_up(tm, 8), _round_up(M, 8))
    tv_eff = min(_round_up(tv, 128), _round_up(V, 128))
    m_pad = _round_up(M, tm_eff)
    v_pad = _round_up(V, tv_eff)

    if m_pad != M:
        x2d = jnp.pad(x2d, ((0, m_pad - M), (0, 0)))
    dec_w = decoder_w
    dec_b = decoder_b
    if v_pad != V:
        dec_w = jnp.pad(decoder_w, ((0, v_pad - V), (0, 0)))
        dec_b = jnp.pad(decoder_b, ((0, v_pad - V),))

    bd2d = dense_b.reshape(1, H)
    g2d = ln_gamma.reshape(1, H)
    be2d = ln_beta.reshape(1, H)
    bv2d = dec_b.reshape(1, v_pad)

    grid = (m_pad // tm_eff, v_pad // tv_eff)

    out = pl.pallas_call(
        _mlm_head_kernel,
        out_shape=jax.ShapeDtypeStruct((m_pad, v_pad), sequence_output.dtype),
        grid_spec=pltpu.PrefetchScalarGridSpec(
            num_scalar_prefetch=0,
            grid=grid,
            in_specs=[
                pl.BlockSpec((tm_eff, H), lambda i, j: (i, 0)),   # x rows tile
                pl.BlockSpec((H, H), lambda i, j: (0, 0)),        # dense W (resident)
                pl.BlockSpec((1, H), lambda i, j: (0, 0)),        # dense bias
                pl.BlockSpec((1, H), lambda i, j: (0, 0)),        # LN gamma
                pl.BlockSpec((1, H), lambda i, j: (0, 0)),        # LN beta
                pl.BlockSpec((tv_eff, H), lambda i, j: (j, 0)),   # decoder W tile
                pl.BlockSpec((1, tv_eff), lambda i, j: (0, j)),   # decoder bias tile
            ],
            out_specs=pl.BlockSpec((tm_eff, tv_eff), lambda i, j: (i, j)),
            scratch_shapes=[pltpu.VMEM((tm_eff, H), sequence_output.dtype)],
        ),
        compiler_params=pltpu.CompilerParams(
            dimension_semantics=("parallel", "arbitrary"),
            vmem_limit_bytes=vmem_limit_bytes,
        ),
    )(x2d, dense_w, bd2d, g2d, be2d, dec_w, bv2d)

    return out[:M, :V].reshape(B, S, V)


def _reference(x, dense_w, dense_b, ln_gamma, ln_beta, decoder_w, decoder_b):
    hi = jax.lax.Precision.HIGHEST
    h = jnp.einsum("bsh,oh->bso", x, dense_w, precision=hi) + dense_b
    h = h * 0.5 * (1.0 + lax.erf(h / math.sqrt(2.0)))
    u = jnp.mean(h, axis=-1, keepdims=True)
    s = jnp.mean((h - u) ** 2, axis=-1, keepdims=True)
    h = (h - u) / jnp.sqrt(s + 1e-12)
    h = ln_gamma * h + ln_beta
    return jnp.einsum("bsh,vh->bsv", h, decoder_w, precision=hi) + decoder_b


if __name__ == "__main__":
    B, S, H, V = 2, 8, 128, 512  # small shapes: batch=2, seq=8, hidden=128, vocab=512

    key = jax.random.PRNGKey(0)
    ks = jax.random.split(key, 7)

    x = jax.random.normal(ks[0], (B, S, H), dtype=jnp.float32)
    # synthetic parameters matching nn.Linear(H, H) / BertLayerNorm(H) /
    # decoder = nn.Linear(H, V, bias=False) with tied embedding weights [V, H]
    dense_w = jax.random.normal(ks[1], (H, H), dtype=jnp.float32) * 0.02
    dense_b = jax.random.normal(ks[2], (H,), dtype=jnp.float32) * 0.02
    ln_gamma = 1.0 + 0.1 * jax.random.normal(ks[3], (H,), dtype=jnp.float32)
    ln_beta = 0.1 * jax.random.normal(ks[4], (H,), dtype=jnp.float32)
    decoder_w = jax.random.normal(ks[5], (V, H), dtype=jnp.float32) * 0.02
    decoder_b = 0.02 * jax.random.normal(ks[6], (V,), dtype=jnp.float32)

    out = bert_only_mlm_head(x, dense_w, dense_b, ln_gamma, ln_beta,
                             decoder_w, decoder_b)
    out = jax.block_until_ready(out)

    ref = _reference(x, dense_w, dense_b, ln_gamma, ln_beta, decoder_w, decoder_b)
    assert out.shape == (B, S, V)
    assert jnp.allclose(out, ref, atol=2e-4, rtol=2e-4), "mismatch vs reference"

    print("KERNEL_OK")
</pallas_src>

<mosaic_0001>
module attributes {stable_mosaic.version = 11 : i64} {
  func.func @_mlm_head_kernel(%arg0: i32, %arg1: i32, %arg2: memref<16x128xf32, #tpu.memory_space<vmem>>, %arg3: memref<128x128xf32, #tpu.memory_space<vmem>>, %arg4: memref<1x128xf32, #tpu.memory_space<vmem>>, %arg5: memref<1x128xf32, #tpu.memory_space<vmem>>, %arg6: memref<1x128xf32, #tpu.memory_space<vmem>>, %arg7: memref<512x128xf32, #tpu.memory_space<vmem>>, %arg8: memref<1x512xf32, #tpu.memory_space<vmem>>, %arg9: memref<16x512xf32, #tpu.memory_space<vmem>>, %arg10: memref<16x128xf32, #tpu.memory_space<vmem>>) attributes {dimension_semantics = [#tpu.dimension_semantics<parallel>, #tpu.dimension_semantics<arbitrary>], iteration_bounds = array<i64: 1, 1>, scalar_prefetch = 0 : i64, scratch_operands = 1 : i64, tpu.core_type = #tpu.core_type<tc>, window_params = [{transform_indices = @transform_0, window_bounds = array<i64: 16, 128>}, {pipeline_mode = #tpu.pipeline_mode<synchronous>, transform_indices = @transform_1, window_bounds = array<i64: 128, 128>}, {pipeline_mode = #tpu.pipeline_mode<synchronous>, transform_indices = @transform_2, window_bounds = array<i64: 1, 128>}, {pipeline_mode = #tpu.pipeline_mode<synchronous>, transform_indices = @transform_3, window_bounds = array<i64: 1, 128>}, {pipeline_mode = #tpu.pipeline_mode<synchronous>, transform_indices = @transform_4, window_bounds = array<i64: 1, 128>}, {transform_indices = @transform_5, window_bounds = array<i64: 512, 128>}, {transform_indices = @transform_6, window_bounds = array<i64: 1, 512>}, {transform_indices = @transform_7, window_bounds = array<i64: 16, 512>}]} {
    %c0_i32 = arith.constant 0 : i32
    %0 = arith.cmpi eq, %arg1, %c0_i32 : i32
    %1 = arith.extui %0 : i1 to i32
    %c0_i32_0 = arith.constant 0 : i32
    %2 = arith.cmpi ne, %1, %c0_i32_0 : i32
    scf.if %2 {
      %c0_8 = arith.constant 0 : index
      %c0_9 = arith.constant 0 : index
      %10 = vector.load %arg2[%c0_8, %c0_9] : memref<16x128xf32, #tpu.memory_space<vmem>>, vector<16x128xf32>
      %c0_10 = arith.constant 0 : index
      %c0_11 = arith.constant 0 : index
      %11 = vector.load %arg3[%c0_10, %c0_11] : memref<128x128xf32, #tpu.memory_space<vmem>>, vector<128x128xf32>
      %cst_12 = arith.constant dense<0.000000e+00> : vector<16x128xf32>
      %12 = tpu.matmul %10, %11, %cst_12 {dimension_numbers = #tpu.dot_dimension_numbers<[1], [1], [0], [0], [0, 0, 1, 0], [], []>} : vector<16x128xf32>, vector<128x128xf32>, vector<16x128xf32> -> vector<16x128xf32>
      %c0_13 = arith.constant 0 : index
      %c0_14 = arith.constant 0 : index
      %13 = vector.load %arg4[%c0_13, %c0_14] : memref<1x128xf32, #tpu.memory_space<vmem>>, vector<1x128xf32>
      %14 = vector.broadcast %13 : vector<1x128xf32> to vector<16x128xf32>
      %15 = arith.addf %12, %14 : vector<16x128xf32>
      %cst_15 = arith.constant 5.000000e-01 : f32
      %16 = vector.broadcast %cst_15 : f32 to vector<16x128xf32>
      %17 = arith.mulf %15, %16 : vector<16x128xf32>
      %cst_16 = arith.constant 0.707106769 : f32
      %18 = vector.broadcast %cst_16 : f32 to vector<16x128xf32>
      %19 = arith.mulf %15, %18 : vector<16x128xf32>
      %20 = math.erf %19 : vector<16x128xf32>
      %cst_17 = arith.constant 1.000000e+00 : f32
      %21 = vector.broadcast %cst_17 : f32 to vector<16x128xf32>
      %22 = arith.addf %21, %20 : vector<16x128xf32>
      %23 = arith.mulf %17, %22 : vector<16x128xf32>
      %cst_18 = arith.constant dense<0.000000e+00> : vector<16xf32>
      %24 = vector.multi_reduction <add>, %23, %cst_18 [1] : vector<16x128xf32> to vector<16xf32>
      %25 = vector.shape_cast %24 : vector<16xf32> to vector<16x1xf32>
      %cst_19 = arith.constant 7.812500e-03 : f32
      %26 = vector.broadcast %cst_19 : f32 to vector<16x1xf32>
      %27 = arith.mulf %25, %26 : vector<16x1xf32>
      %28 = vector.broadcast %27 : vector<16x1xf32> to vector<16x128xf32>
      %29 = arith.subf %23, %28 : vector<16x128xf32>
      %30 = arith.mulf %29, %29 : vector<16x128xf32>
      %cst_20 = arith.constant dense<0.000000e+00> : vector<16xf32>
      %31 = vector.multi_reduction <add>, %30, %cst_20 [1] : vector<16x128xf32> to vector<16xf32>
      %32 = vector.shape_cast %31 : vector<16xf32> to vector<16x1xf32>
      %cst_21 = arith.constant 7.812500e-03 : f32
      %33 = vector.broadcast %cst_21 : f32 to vector<16x1xf32>
      %34 = arith.mulf %32, %33 : vector<16x1xf32>
      %cst_22 = arith.constant 9.99999996E-13 : f32
      %35 = vector.broadcast %cst_22 : f32 to vector<16x1xf32>
      %36 = arith.addf %34, %35 : vector<16x1xf32>
      %37 = math.rsqrt %36 : vector<16x1xf32>
      %38 = vector.broadcast %37 : vector<16x1xf32> to vector<16x128xf32>
      %39 = arith.mulf %29, %38 : vector<16x128xf32>
      %c0_23 = arith.constant 0 : index
      %c0_24 = arith.constant 0 : index
      %40 = vector.load %arg5[%c0_23, %c0_24] : memref<1x128xf32, #tpu.memory_space<vmem>>, vector<1x128xf32>
      %41 = vector.broadcast %40 : vector<1x128xf32> to vector<16x128xf32>
      %42 = arith.mulf %41, %39 : vector<16x128xf32>
      %c0_25 = arith.constant 0 : index
      %c0_26 = arith.constant 0 : index
      %43 = vector.load %arg6[%c0_25, %c0_26] : memref<1x128xf32, #tpu.memory_space<vmem>>, vector<1x128xf32>
      %44 = vector.broadcast %43 : vector<1x128xf32> to vector<16x128xf32>
      %45 = arith.addf %42, %44 : vector<16x128xf32>
      %c0_27 = arith.constant 0 : index
      %c0_28 = arith.constant 0 : index
      %46 = vector.load %arg10[%c0_27, %c0_28] : memref<16x128xf32, #tpu.memory_space<vmem>>, vector<16x128xf32>
      tpu.vector_store %arg10[%c0_27, %c0_28], %45 {strides = array<i32>} : memref<16x128xf32, #tpu.memory_space<vmem>>, vector<16x128xf32>,
    } else {
    }
    %c0 = arith.constant 0 : index
    %c0_1 = arith.constant 0 : index
    %3 = vector.load %arg10[%c0, %c0_1] : memref<16x128xf32, #tpu.memory_space<vmem>>, vector<16x128xf32>
    %c0_2 = arith.constant 0 : index
    %c0_3 = arith.constant 0 : index
    %4 = vector.load %arg7[%c0_2, %c0_3] : memref<512x128xf32, #tpu.memory_space<vmem>>, vector<512x128xf32>
    %cst = arith.constant dense<0.000000e+00> : vector<16x512xf32>
    %5 = tpu.matmul %3, %4, %cst {dimension_numbers = #tpu.dot_dimension_numbers<[1], [1], [0], [0], [0, 0, 1, 0], [], []>} : vector<16x128xf32>, vector<512x128xf32>, vector<16x512xf32> -> vector<16x512xf32>
    %c0_4 = arith.constant 0 : index
    %c0_5 = arith.constant 0 : index
    %6 = vector.load %arg8[%c0_4, %c0_5] : memref<1x512xf32, #tpu.memory_space<vmem>>, vector<1x512xf32>
    %7 = vector.broadcast %6 : vector<1x512xf32> to vector<16x512xf32>
    %8 = arith.addf %5, %7 : vector<16x512xf32>
    %c0_6 = arith.constant 0 : index
    %c0_7 = arith.constant 0 : index
    %9 = vector.load %arg9[%c0_6, %c0_7] : memref<16x512xf32, #tpu.memory_space<vmem>>, vector<16x512xf32>
    tpu.vector_store %arg9[%c0_6, %c0_7], %8 {strides = array<i32>} : memref<16x512xf32, #tpu.memory_space<vmem>>, vector<16x512xf32>,
    return
  }
  func.func @transform_0(%arg0: i32, %arg1: i32) -> (i32, i32) {
    %c0_i32 = arith.constant 0 : i32
    %c0_i32_0 = arith.constant 0 : i32
    return %arg0, %c0_i32 : i32, i32
  }
  func.func @transform_1(%arg0: i32, %arg1: i32) -> (i32, i32) {
    %c0_i32 = arith.constant 0 : i32
    %c0_i32_0 = arith.constant 0 : i32
    %c0_i32_1 = arith.constant 0 : i32
    return %c0_i32, %c0_i32_0 : i32, i32
  }
  func.func @transform_2(%arg0: i32, %arg1: i32) -> (i32, i32) {
    %c0_i32 = arith.constant 0 : i32
    %c0_i32_0 = arith.constant 0 : i32
    %c0_i32_1 = arith.constant 0 : i32
    return %c0_i32, %c0_i32_0 : i32, i32
  }
  func.func @transform_3(%arg0: i32, %arg1: i32) -> (i32, i32) {
    %c0_i32 = arith.constant 0 : i32
    %c0_i32_0 = arith.constant 0 : i32
    %c0_i32_1 = arith.constant 0 : i32
    return %c0_i32, %c0_i32_0 : i32, i32
  }
  func.func @transform_4(%arg0: i32, %arg1: i32) -> (i32, i32) {
    %c0_i32 = arith.constant 0 : i32
    %c0_i32_0 = arith.constant 0 : i32
    %c0_i32_1 = arith.constant 0 : i32
    return %c0_i32, %c0_i32_0 : i32, i32
  }
  func.func @transform_5(%arg0: i32, %arg1: i32) -> (i32, i32) {
    %c0_i32 = arith.constant 0 : i32
    %c0_i32_0 = arith.constant 0 : i32
    return %arg1, %c0_i32 : i32, i32
  }
  func.func @transform_6(%arg0: i32, %arg1: i32) -> (i32, i32) {
    %c0_i32 = arith.constant 0 : i32
    %c0_i32_0 = arith.constant 0 : i32
    return %c0_i32, %arg1 : i32, i32
  }
  func.func @transform_7(%arg0: i32, %arg1: i32) -> (i32, i32) {
    %c0_i32 = arith.constant 0 : i32
    return %arg0, %arg1 : i32, i32
  }
}

</mosaic_0001>

<llo_original>
// kernel: tpu_custom_call.1
$region0: #{tpu_custom_call.1}
  #allocation0 [shape = 'u32[]', space=smem, size = 0x4, offset = 0x4, fixed_abs, tag = 'smem constant byte address 0x4 - core index']
  #allocation1 [shape = 'u32[144,128]{1,0:T(1,128)}', space=vmem, size = 0x12000, scoped, tag = 'internal scratch']
  #allocation2 [shape = 'f32[16,128]{1,0:T(8,128)}', space=vmem, size = 0x2000, scoped, tag = 'scratch operand']
  %s0 = inlined_call_operand.hbm [shape: f32[16,128], index: 0, kind: input, shape index: {}]
  %s1 = inlined_call_operand.hbm [shape: f32[128,128], index: 1, kind: input, shape index: {}]
  %s2 = inlined_call_operand.vmem [shape: f32[1,128], index: 2, kind: input, shape index: {}]
  %s3 = inlined_call_operand.vmem [shape: f32[1,128], index: 3, kind: input, shape index: {}]
  %s4 = inlined_call_operand.vmem [shape: f32[1,128], index: 4, kind: input, shape index: {}]
  %s5 = inlined_call_operand.hbm [shape: f32[512,128], index: 5, kind: input, shape index: {}]
  %s6 = inlined_call_operand.vmem [shape: f32[1,512], index: 6, kind: input, shape index: {}]
  %s7 = inlined_call_operand.hbm [shape: f32[16,512], index: 7, kind: output, shape index: {}]
  %s8 = sld [smem:[#allocation0]]
  $region54: #{tpu_custom_call.1} parent=0
    _
  %s10 = ssub.s32 1, %s8
  %s11 = scalar_select 0, %s10, %s8
  $region1: #{tpu_custom_call.1} parent=0
    #allocation3 [shape = 'u8[8192]{0}', space=vmem, size = 0x2000, scoped, tag = 'input window, operand 0, single buffered']
    #allocation4 [shape = 's32[1]{0}', space=sflag, size = 0x4, scoped, tag = 'scoped memory for tpu_custom_call.1']
    #allocation5 [shape = 's32[1]{0}', space=sflag, size = 0x4, scoped, tag = 'scoped memory for tpu_custom_call.1']
    #allocation6 [shape = 'u8[65536]{0}', space=vmem, size = 0x10000, scoped, tag = 'input window, operand 1, single buffered']
    #allocation7 [shape = 's32[1]{0}', space=sflag, size = 0x4, scoped, tag = 'scoped memory for tpu_custom_call.1']
    #allocation8 [shape = 'u8[262144]{0}', space=vmem, size = 0x40000, scoped, tag = 'input window, operand 5, single buffered']
    #allocation9 [shape = 'u8[32768]{0}', space=vmem, size = 0x8000, scoped, tag = 'output window, operand 0, single buffered']
    %12 = vsyncpa [#allocation4], 0
    %13 = vsyncpa [#allocation7], 0
    %14 = vsyncpa [#allocation5], 0
    // Predicated region
    $region2: #{tpu_custom_call.1} parent=1 // pred_check
      _
    $region3: #{tpu_custom_call.1} parent=1 // pred_check_branch
      %16 = sbr.rel (0) target = $region5
    $region4: #{tpu_custom_call.1} parent=1 // pred_region
      %s18 = ssub.s32 256, 256
      %19 = vsyncadd [#allocation4], %s18
      %s20 = sshll.u32 [#allocation3], 4
      %s21 = int_to_ptr.vmem [resolvable:$true] %s20
      %26 = dma.hbm_to_vmem [thread:$0]  %s0, 256, %s21, [#allocation4], 128, 128, 8
    $region5: #{tpu_custom_call.1} parent=1 // pred_fallthru
      _
    // Predicated region
    $region6: #{tpu_custom_call.1} parent=1 // pred_check
      _
    $region7: #{tpu_custom_call.1} parent=1 // pred_check_branch
      %28 = sbr.rel (0) target = $region9
    $region8: #{tpu_custom_call.1} parent=1 // pred_region
      %s30 = ssub.s32 2048, 2048
      %31 = vsyncadd [#allocation7], %s30
      %s32 = sshll.u32 [#allocation6], 4
      %s33 = int_to_ptr.vmem [resolvable:$true] %s32
      %38 = dma.hbm_to_vmem [thread:$0]  %s1, 2048, %s33, [#allocation7], 128, 128, 8
    $region9: #{tpu_custom_call.1} parent=1 // pred_fallthru
      _
    // Predicated region
    $region10: #{tpu_custom_call.1} parent=1 // pred_check
      _
    $region11: #{tpu_custom_call.1} parent=1 // pred_check_branch
      %40 = sbr.rel (0) target = $region13
    $region12: #{tpu_custom_call.1} parent=1 // pred_region
      _
    $region13: #{tpu_custom_call.1} parent=1 // pred_fallthru
      _
    // Predicated region
    $region14: #{tpu_custom_call.1} parent=1 // pred_check
      _
    $region15: #{tpu_custom_call.1} parent=1 // pred_check_branch
      %42 = sbr.rel (0) target = $region17
    $region16: #{tpu_custom_call.1} parent=1 // pred_region
      _
    $region17: #{tpu_custom_call.1} parent=1 // pred_fallthru
      _
    // Predicated region
    $region18: #{tpu_custom_call.1} parent=1 // pred_check
      _
    $region19: #{tpu_custom_call.1} parent=1 // pred_check_branch
      %44 = sbr.rel (0) target = $region21
    $region20: #{tpu_custom_call.1} parent=1 // pred_region
      _
    $region21: #{tpu_custom_call.1} parent=1 // pred_fallthru
      _
    // Predicated region
    $region22: #{tpu_custom_call.1} parent=1 // pred_check
      _
    $region23: #{tpu_custom_call.1} parent=1 // pred_check_branch
      %46 = sbr.rel (0) target = $region25
    $region24: #{tpu_custom_call.1} parent=1 // pred_region
      %s48 = ssub.s32 8192, 8192
      %49 = vsyncadd [#allocation7], %s48
      %s50 = sshll.u32 [#allocation8], 4
      %s51 = int_to_ptr.vmem [resolvable:$true] %s50
      %56 = dma.hbm_to_vmem [thread:$0]  %s5, 8192, %s51, [#allocation7], 128, 128, 8
    $region25: #{tpu_custom_call.1} parent=1 // pred_fallthru
      _
    // Predicated region
    $region26: #{tpu_custom_call.1} parent=1 // pred_check
      _
    $region27: #{tpu_custom_call.1} parent=1 // pred_check_branch
      %58 = sbr.rel (0) target = $region29
    $region28: #{tpu_custom_call.1} parent=1 // pred_region
      _
    $region29: #{tpu_custom_call.1} parent=1 // pred_fallthru
      _
    // Predicated region
    $region30: #{tpu_custom_call.1} parent=1 // pred_check
      _
    $region31: #{tpu_custom_call.1} parent=1 // pred_check_branch
      %60 = sbr.rel (0) target = $region33
    $region32: #{tpu_custom_call.1} parent=1 // pred_region
      %61 = dma.done [#allocation4], 256
    $region33: #{tpu_custom_call.1} parent=1 // pred_fallthru
      _
    // Predicated region
    $region34: #{tpu_custom_call.1} parent=1 // pred_check
      _
    $region35: #{tpu_custom_call.1} parent=1 // pred_check_branch
      %63 = sbr.rel (0) target = $region37
    $region36: #{tpu_custom_call.1} parent=1 // pred_region
      %64 = dma.done [#allocation7], 2048
    $region37: #{tpu_custom_call.1} parent=1 // pred_fallthru
      _
    // Predicated region
    $region38: #{tpu_custom_call.1} parent=1 // pred_check
      _
    $region39: #{tpu_custom_call.1} parent=1 // pred_check_branch
      %66 = sbr.rel (0) target = $region41
    $region40: #{tpu_custom_call.1} parent=1 // pred_region
      %67 = dma.done [#allocation7], 8192
    $region41: #{tpu_custom_call.1} parent=1 // pred_fallthru
      _
    %p68 = scmp.eq.s32.totalorder 0, 0
    // Predicated region
    $region42: #{tpu_custom_call.1} parent=1 // pred_check
      %p69 = pneg %p68
    $region43: #{tpu_custom_call.1} parent=1 // pred_check_branch
      %71 = sbr.rel (%p69) target = $region45
    $region44: #{tpu_custom_call.1} parent=1 // pred_region
      %v72 = vld [vmem:[#allocation3] sm:$0xff]
      %v73 = vld [vmem:[#allocation3 + $0x8] sm:$0xff]
      %v74 = vld [vmem:[#allocation6] sm:$0xff]
      %v75 = vld [vmem:[#allocation6 + $0x8] sm:$0xff]
      %v76 = vld [vmem:[#allocation6 + $0x10] sm:$0xff]
      %v77 = vld [vmem:[#allocation6 + $0x18] sm:$0xff]
      %v78 = vld [vmem:[#allocation6 + $0x20] sm:$0xff]
      %v79 = vld [vmem:[#allocation6 + $0x28] sm:$0xff]
      %v80 = vld [vmem:[#allocation6 + $0x30] sm:$0xff]
      %v81 = vld [vmem:[#allocation6 + $0x38] sm:$0xff]
      %v82 = vld [vmem:[#allocation6 + $0x40] sm:$0xff]
      %v83 = vld [vmem:[#allocation6 + $0x48] sm:$0xff]
      %v84 = vld [vmem:[#allocation6 + $0x50] sm:$0xff]
      %v85 = vld [vmem:[#allocation6 + $0x58] sm:$0xff]
      %v86 = vld [vmem:[#allocation6 + $0x60] sm:$0xff]
      %v87 = vld [vmem:[#allocation6 + $0x68] sm:$0xff]
      %v88 = vld [vmem:[#allocation6 + $0x70] sm:$0xff]
      %v89 = vld [vmem:[#allocation6 + $0x78] sm:$0xff]
      %v90 = vld [vmem:[%s2] sm:$0x1]
      %v92 = vlaneseq
      %v93 = vshrl.u32 %v92, 7
      %v94 = vsub.s32 0, %v93
      %v95 = vrot.slane %v90, %v94
      %97 = vmatprep.subr.mxu0 0.0
      %98 = vmatpush1.xpose.msra.mxu0 %v89
      %99 = vmatprep.subr.mxu0 0.0
      %100 = vmatpush1.xpose.msra.mxu0 %v88
      %101 = vmatprep.subr.mxu0 0.0
      %102 = vmatpush1.xpose.msra.mxu0 %v87
      %103 = vmatprep.subr.mxu0 0.0
      %104 = vmatpush1.xpose.msra.mxu0 %v86
      %105 = vmatprep.subr.mxu0 0.0
      %106 = vmatpush1.xpose.msra.mxu0 %v85
      %107 = vmatprep.subr.mxu0 0.0
      %108 = vmatpush1.xpose.msra.mxu0 %v84
      %109 = vmatprep.subr.mxu0 0.0
      %110 = vmatpush1.xpose.msra.mxu0 %v83
      %111 = vmatprep.subr.mxu0 0.0
      %112 = vmatpush1.xpose.msra.mxu0 %v82
      %113 = vmatprep.subr.mxu0 0.0
      %114 = vmatpush1.xpose.msra.mxu0 %v81
      %115 = vmatprep.subr.mxu0 0.0
      %116 = vmatpush1.xpose.msra.mxu0 %v80
      %117 = vmatprep.subr.mxu0 0.0
      %118 = vmatpush1.xpose.msra.mxu0 %v79
      %119 = vmatprep.subr.mxu0 0.0
      %120 = vmatpush1.xpose.msra.mxu0 %v78
      %121 = vmatprep.subr.mxu0 0.0
      %122 = vmatpush1.xpose.msra.mxu0 %v77
      %123 = vmatprep.subr.mxu0 0.0
      %124 = vmatpush1.xpose.msra.mxu0 %v76
      %125 = vmatprep.subr.mxu0 0.0
      %126 = vmatpush1.xpose.msra.mxu0 %v75
      %127 = vmatprep.subr.mxu0 0.0
      %128 = vmatpush1.xpose.msra.mxu0 %v74
      %129 = vmatprep.subr.mxu0 0.0
      %130 = vmatpush2.xpose.msra.mxu0 0.0
      %131 = vmatprep.subr.mxu0 0.0
      %132 = vmatpush2.xpose.msra.mxu0 0.0
      %133 = vmatprep.subr.mxu0 0.0
      %134 = vmatpush2.xpose.msra.mxu0 0.0
      %135 = vmatprep.subr.mxu0 0.0
      %136 = vmatpush2.xpose.msra.mxu0 0.0
      %137 = vmatprep.subr.mxu0 0.0
      %138 = vmatpush2.xpose.msra.mxu0 0.0
      %139 = vmatprep.subr.mxu0 0.0
      %140 = vmatpush2.xpose.msra.mxu0 0.0
      %141 = vmatprep.subr.mxu0 0.0
      %142 = vmatpush2.xpose.msra.mxu0 0.0
      %143 = vmatprep.subr.mxu0 0.0
      %144 = vmatpush2.xpose.msra.mxu0 0.0
      %145 = vmatprep.subr.mxu0 0.0
      %146 = vmatpush2.xpose.msra.mxu0 0.0
      %147 = vmatprep.subr.mxu0 0.0
      %148 = vmatpush2.xpose.msra.mxu0 0.0
      %149 = vmatprep.subr.mxu0 0.0
      %150 = vmatpush2.xpose.msra.mxu0 0.0
      %151 = vmatprep.subr.mxu0 0.0
      %152 = vmatpush2.xpose.msra.mxu0 0.0
      %153 = vmatprep.subr.mxu0 0.0
      %154 = vmatpush2.xpose.msra.mxu0 0.0
      %155 = vmatprep.subr.mxu0 0.0
      %156 = vmatpush2.xpose.msra.mxu0 0.0
      %157 = vmatprep.subr.mxu0 0.0
      %158 = vmatpush2.xpose.msra.mxu0 0.0
      %159 = vmatprep.subr.mxu0 0.0
      %160 = vmatpush2.xpose.msra.mxu0 0.0
      %161 = vmatprep.mubr.f32.mxu0 0.0
      %162 = vmatmul.mubr.f32.gmra.mxu0 %v72
      %v163 = vpop.f32.mrf.mxu0
      %v164 = vadd.f32 %v95, %v163
      %v165 = vpop.f32.mrf.mxu0
      %166 = vmatprep.mubr.f32.mxu0 0.0
      %167 = vmatmul.mubr.f32.gmra.mxu0 %v73
      %v168 = vpop.f32.mrf.mxu0
      %v169 = vadd.f32 %v95, %v168
      %v170 = vpop.f32.mrf.mxu0
      %171 = vdwg.mxu0
      %v172 = vmul.f32 %v164, 0.5
      %v173 = vmul.f32 %v169, 0.5
      %v174 = vmul.f32 %v164, 0.70710677
      %v175 = vmul.f32 %v169, 0.70710677
      %v176 = verf.f32.pop %v174
      %v177 = verf.f32.pop %v175
      %v178 = vadd.f32 %v176, 1.0
      %v179 = vadd.f32 %v177, 1.0
      %v180 = vmul.f32 %v172, %v178
      %v181 = vmul.f32 %v173, %v179
      %182 = vadd.xlane.f32.xlu0 %v180
      %v183 = vpop.xlane.xlu0 %182
      %184 = vadd.xlane.f32.xlu0 %v181
      %v185 = vpop.xlane.xlu0 %184
      %v186 = vmul.f32 %v183, 0.0078125
      %v187 = vmul.f32 %v185, 0.0078125
      %v188 = vsub.f32 %v180, %v186
      %v189 = vsub.f32 %v181, %v187
      %v190 = vmul.f32 %v188, %v188
      %v191 = vmul.f32 %v189, %v189
      %192 = vadd.xlane.f32.xlu0 %v190
      %v193 = vpop.xlane.xlu0 %192
      %194 = vadd.xlane.f32.xlu0 %v191
      %v195 = vpop.xlane.xlu0 %194
      %v196 = vmul.f32 %v193, 0.0078125
      %v197 = vmul.f32 %v195, 0.0078125
      %v198 = vadd.f32 %v196, 1e-12
      %v199 = vadd.f32 %v197, 1e-12
      %v200 = vrsqrt.pop %v198
      %v201 = vrsqrt.pop %v199
      %v202 = vmul.f32 %v188, %v200
      %v203 = vmul.f32 %v189, %v201
      %v204 = vld [vmem:[%s3] sm:$0x1]
      %v206 = vlaneseq
      %v207 = vshrl.u32 %v206, 7
      %v208 = vsub.s32 0, %v207
      %v209 = vrot.slane %v204, %v208
      %v211 = vmul.f32 %v209, %v202
      %v212 = vmul.f32 %v209, %v203
      %v213 = vld [vmem:[%s4] sm:$0x1]
      %v215 = vlaneseq
      %v216 = vshrl.u32 %v215, 7
      %v217 = vsub.s32 0, %v216
      %v218 = vrot.slane %v213, %v217
      %v220 = vadd.f32 %v211, %v218
      %v221 = vadd.f32 %v212, %v218
      %222 = vst [vmem:[#allocation2] sm:$0xff] %v220
      %223 = vst [vmem:[#allocation2 + $0x8] sm:$0xff] %v221
    $region45: #{tpu_custom_call.1} parent=1 // pred_fallthru
      _
    %v224 = vld [vmem:[#allocation2] sm:$0xff]
    %v225 = vld [vmem:[#allocation2 + $0x8] sm:$0xff]
    %v226 = vld [vmem:[#allocation8] sm:$0xff]
    %v227 = vld [vmem:[#allocation8 + $0x8] sm:$0xff]
    %v228 = vld [vmem:[#allocation8 + $0x10] sm:$0xff]
    %v229 = vld [vmem:[#allocation8 + $0x18] sm:$0xff]
    %v230 = vld [vmem:[#allocation8 + $0x20] sm:$0xff]
    %v231 = vld [vmem:[#allocation8 + $0x28] sm:$0xff]
    %v232 = vld [vmem:[#allocation8 + $0x30] sm:$0xff]
    %v233 = vld [vmem:[#allocation8 + $0x38] sm:$0xff]
    %v234 = vld [vmem:[#allocation8 + $0x40] sm:$0xff]
    %v235 = vld [vmem:[#allocation8 + $0x48] sm:$0xff]
    %v236 = vld [vmem:[#allocation8 + $0x50] sm:$0xff]
    %v237 = vld [vmem:[#allocation8 + $0x58] sm:$0xff]
    %v238 = vld [vmem:[#allocation8 + $0x60] sm:$0xff]
    %v239 = vld [vmem:[#allocation8 + $0x68] sm:$0xff]
    %v240 = vld [vmem:[#allocation8 + $0x70] sm:$0xff]
    %v241 = vld [vmem:[#allocation8 + $0x78] sm:$0xff]
    %v242 = vld [vmem:[#allocation8 + $0x80] sm:$0xff]
    %v243 = vld [vmem:[#allocation8 + $0x88] sm:$0xff]
    %v244 = vld [vmem:[#allocation8 + $0x90] sm:$0xff]
    %v245 = vld [vmem:[#allocation8 + $0x98] sm:$0xff]
    %v246 = vld [vmem:[#allocation8 + $0xa0] sm:$0xff]
    %v247 = vld [vmem:[#allocation8 + $0xa8] sm:$0xff]
    %v248 = vld [vmem:[#allocation8 + $0xb0] sm:$0xff]
    %v249 = vld [vmem:[#allocation8 + $0xb8] sm:$0xff]
    %v250 = vld [vmem:[#allocation8 + $0xc0] sm:$0xff]
    %v251 = vld [vmem:[#allocation8 + $0xc8] sm:$0xff]
    %v252 = vld [vmem:[#allocation8 + $0xd0] sm:$0xff]
    %v253 = vld [vmem:[#allocation8 + $0xd8] sm:$0xff]
    %v254 = vld [vmem:[#allocation8 + $0xe0] sm:$0xff]
    %v255 = vld [vmem:[#allocation8 + $0xe8] sm:$0xff]
    %v256 = vld [vmem:[#allocation8 + $0xf0] sm:$0xff]
    %v257 = vld [vmem:[#allocation8 + $0xf8] sm:$0xff]
    %v258 = vld [vmem:[#allocation8 + $0x100] sm:$0xff]
    %v259 = vld [vmem:[#allocation8 + $0x108] sm:$0xff]
    %v260 = vld [vmem:[#allocation8 + $0x110] sm:$0xff]
    %v261 = vld [vmem:[#allocation8 + $0x118] sm:$0xff]
    %v262 = vld [vmem:[#allocation8 + $0x120] sm:$0xff]
    %v263 = vld [vmem:[#allocation8 + $0x128] sm:$0xff]
    %v264 = vld [vmem:[#allocation8 + $0x130] sm:$0xff]
    %v265 = vld [vmem:[#allocation8 + $0x138] sm:$0xff]
    %v266 = vld [vmem:[#allocation8 + $0x140] sm:$0xff]
    %v267 = vld [vmem:[#allocation8 + $0x148] sm:$0xff]
    %v268 = vld [vmem:[#allocation8 + $0x150] sm:$0xff]
    %v269 = vld [vmem:[#allocation8 + $0x158] sm:$0xff]
    %v270 = vld [vmem:[#allocation8 + $0x160] sm:$0xff]
    %v271 = vld [vmem:[#allocation8 + $0x168] sm:$0xff]
    %v272 = vld [vmem:[#allocation8 + $0x170] sm:$0xff]
    %v273 = vld [vmem:[#allocation8 + $0x178] sm:$0xff]
    %v274 = vld [vmem:[#allocation8 + $0x180] sm:$0xff]
    %v275 = vld [vmem:[#allocation8 + $0x188] sm:$0xff]
    %v276 = vld [vmem:[#allocation8 + $0x190] sm:$0xff]
    %v277 = vld [vmem:[#allocation8 + $0x198] sm:$0xff]
    %v278 = vld [vmem:[#allocation8 + $0x1a0] sm:$0xff]
    %v279 = vld [vmem:[#allocation8 + $0x1a8] sm:$0xff]
    %v280 = vld [vmem:[#allocation8 + $0x1b0] sm:$0xff]
    %v281 = vld [vmem:[#allocation8 + $0x1b8] sm:$0xff]
    %v282 = vld [vmem:[#allocation8 + $0x1c0] sm:$0xff]
    %v283 = vld [vmem:[#allocation8 + $0x1c8] sm:$0xff]
    %v284 = vld [vmem:[#allocation8 + $0x1d0] sm:$0xff]
    %v285 = vld [vmem:[#allocation8 + $0x1d8] sm:$0xff]
    %v286 = vld [vmem:[#allocation8 + $0x1e0] sm:$0xff]
    %v287 = vld [vmem:[#allocation8 + $0x1e8] sm:$0xff]
    %v288 = vld [vmem:[#allocation8 + $0x1f0] sm:$0xff]
    %v289 = vld [vmem:[#allocation8 + $0x1f8] sm:$0xff]
    %v290 = vld [vmem:[%s6] sm:$0xf]
    %v292 = vlaneseq
    %v293 = vshrl.u32 %v292, 7
    %v294 = vsub.s32 0, %v293
    %v295 = vrot.slane %v290, %v294
    %v296 = vlaneseq
    %v297 = vshrl.u32 %v296, 7
    %v298 = vsub.s32 1, %v297
    %v299 = vrot.slane %v290, %v298
    %v300 = vlaneseq
    %v301 = vshrl.u32 %v300, 7
    %v302 = vsub.s32 2, %v301
    %v303 = vrot.slane %v290, %v302
    %v304 = vlaneseq
    %v305 = vshrl.u32 %v304, 7
    %v306 = vsub.s32 3, %v305
    %v307 = vrot.slane %v290, %v306
    %312 = vmatprep.subr.mxu0 0.0
    %313 = vmatpush1.xpose.msra.mxu0 %v241
    %314 = vmatprep.subr.mxu0 0.0
    %315 = vmatpush1.xpose.msra.mxu0 %v240
    %316 = vmatprep.subr.mxu0 0.0
    %317 = vmatpush1.xpose.msra.mxu0 %v239
    %318 = vmatprep.subr.mxu0 0.0
    %319 = vmatpush1.xpose.msra.mxu0 %v238
    %320 = vmatprep.subr.mxu0 0.0
    %321 = vmatpush1.xpose.msra.mxu0 %v237
    %322 = vmatprep.subr.mxu0 0.0
    %323 = vmatpush1.xpose.msra.mxu0 %v236
    %324 = vmatprep.subr.mxu0 0.0
    %325 = vmatpush1.xpose.msra.mxu0 %v235
    %326 = vmatprep.subr.mxu0 0.0
    %327 = vmatpush1.xpose.msra.mxu0 %v234
    %328 = vmatprep.subr.mxu0 0.0
    %329 = vmatpush1.xpose.msra.mxu0 %v233
    %330 = vmatprep.subr.mxu0 0.0
    %331 = vmatpush1.xpose.msra.mxu0 %v232
    %332 = vmatprep.subr.mxu0 0.0
    %333 = vmatpush1.xpose.msra.mxu0 %v231
    %334 = vmatprep.subr.mxu0 0.0
    %335 = vmatpush1.xpose.msra.mxu0 %v230
    %336 = vmatprep.subr.mxu0 0.0
    %337 = vmatpush1.xpose.msra.mxu0 %v229
    %338 = vmatprep.subr.mxu0 0.0
    %339 = vmatpush1.xpose.msra.mxu0 %v228
    %340 = vmatprep.subr.mxu0 0.0
    %341 = vmatpush1.xpose.msra.mxu0 %v227
    %342 = vmatprep.subr.mxu0 0.0
    %343 = vmatpush1.xpose.msra.mxu0 %v226
    %344 = vmatprep.subr.mxu0 0.0
    %345 = vmatpush2.xpose.msra.mxu0 %v257
    %346 = vmatprep.subr.mxu0 0.0
    %347 = vmatpush2.xpose.msra.mxu0 %v256
    %348 = vmatprep.subr.mxu0 0.0
    %349 = vmatpush2.xpose.msra.mxu0 %v255
    %350 = vmatprep.subr.mxu0 0.0
    %351 = vmatpush2.xpose.msra.mxu0 %v254
    %352 = vmatprep.subr.mxu0 0.0
    %353 = vmatpush2.xpose.msra.mxu0 %v253
    %354 = vmatprep.subr.mxu0 0.0
    %355 = vmatpush2.xpose.msra.mxu0 %v252
    %356 = vmatprep.subr.mxu0 0.0
    %357 = vmatpush2.xpose.msra.mxu0 %v251
    %358 = vmatprep.subr.mxu0 0.0
    %359 = vmatpush2.xpose.msra.mxu0 %v250
    %360 = vmatprep.subr.mxu0 0.0
    %361 = vmatpush2.xpose.msra.mxu0 %v249
    %362 = vmatprep.subr.mxu0 0.0
    %363 = vmatpush2.xpose.msra.mxu0 %v248
    %364 = vmatprep.subr.mxu0 0.0
    %365 = vmatpush2.xpose.msra.mxu0 %v247
    %366 = vmatprep.subr.mxu0 0.0
    %367 = vmatpush2.xpose.msra.mxu0 %v246
    %368 = vmatprep.subr.mxu0 0.0
    %369 = vmatpush2.xpose.msra.mxu0 %v245
    %370 = vmatprep.subr.mxu0 0.0
    %371 = vmatpush2.xpose.msra.mxu0 %v244
    %372 = vmatprep.subr.mxu0 0.0
    %373 = vmatpush2.xpose.msra.mxu0 %v243
    %374 = vmatprep.subr.mxu0 0.0
    %375 = vmatpush2.xpose.msra.mxu0 %v242
    %376 = vmatprep.mubr.f32.mxu0 0.0
    %377 = vmatmul.mubr.f32.gmra.mxu0 %v224
    %v378 = vpop.f32.mrf.mxu0
    %v379 = vadd.f32 %v295, %v378
    %v380 = vpop.f32.mrf.mxu0
    %v381 = vadd.f32 %v299, %v380
    %382 = vmatprep.mubr.f32.mxu0 0.0
    %383 = vmatmul.mubr.f32.gmra.mxu0 %v225
    %v384 = vpop.f32.mrf.mxu0
    %v385 = vadd.f32 %v295, %v384
    %v386 = vpop.f32.mrf.mxu0
    %v387 = vadd.f32 %v299, %v386
    %388 = vdwg.mxu0
    %389 = vmatprep.subr.mxu0 0.0
    %390 = vmatpush1.xpose.msra.mxu0 %v273
    %391 = vmatprep.subr.mxu0 0.0
    %392 = vmatpush1.xpose.msra.mxu0 %v272
    %393 = vmatprep.subr.mxu0 0.0
    %394 = vmatpush1.xpose.msra.mxu0 %v271
    %395 = vmatprep.subr.mxu0 0.0
    %396 = vmatpush1.xpose.msra.mxu0 %v270
    %397 = vmatprep.subr.mxu0 0.0
    %398 = vmatpush1.xpose.msra.mxu0 %v269
    %399 = vmatprep.subr.mxu0 0.0
    %400 = vmatpush1.xpose.msra.mxu0 %v268
    %401 = vmatprep.subr.mxu0 0.0
    %402 = vmatpush1.xpose.msra.mxu0 %v267
    %403 = vmatprep.subr.mxu0 0.0
    %404 = vmatpush1.xpose.msra.mxu0 %v266
    %405 = vmatprep.subr.mxu0 0.0
    %406 = vmatpush1.xpose.msra.mxu0 %v265
    %407 = vmatprep.subr.mxu0 0.0
    %408 = vmatpush1.xpose.msra.mxu0 %v264
    %409 = vmatprep.subr.mxu0 0.0
    %410 = vmatpush1.xpose.msra.mxu0 %v263
    %411 = vmatprep.subr.mxu0 0.0
    %412 = vmatpush1.xpose.msra.mxu0 %v262
    %413 = vmatprep.subr.mxu0 0.0
    %414 = vmatpush1.xpose.msra.mxu0 %v261
    %415 = vmatprep.subr.mxu0 0.0
    %416 = vmatpush1.xpose.msra.mxu0 %v260
    %417 = vmatprep.subr.mxu0 0.0
    %418 = vmatpush1.xpose.msra.mxu0 %v259
    %419 = vmatprep.subr.mxu0 0.0
    %420 = vmatpush1.xpose.msra.mxu0 %v258
    %421 = vmatprep.subr.mxu0 0.0
    %422 = vmatpush2.xpose.msra.mxu0 %v289
    %423 = vmatprep.subr.mxu0 0.0
    %424 = vmatpush2.xpose.msra.mxu0 %v288
    %425 = vmatprep.subr.mxu0 0.0
    %426 = vmatpush2.xpose.msra.mxu0 %v287
    %427 = vmatprep.subr.mxu0 0.0
    %428 = vmatpush2.xpose.msra.mxu0 %v286
    %429 = vmatprep.subr.mxu0 0.0
    %430 = vmatpush2.xpose.msra.mxu0 %v285
    %431 = vmatprep.subr.mxu0 0.0
    %432 = vmatpush2.xpose.msra.mxu0 %v284
    %433 = vmatprep.subr.mxu0 0.0
    %434 = vmatpush2.xpose.msra.mxu0 %v283
    %435 = vmatprep.subr.mxu0 0.0
    %436 = vmatpush2.xpose.msra.mxu0 %v282
    %437 = vmatprep.subr.mxu0 0.0
    %438 = vmatpush2.xpose.msra.mxu0 %v281
    %439 = vmatprep.subr.mxu0 0.0
    %440 = vmatpush2.xpose.msra.mxu0 %v280
    %441 = vmatprep.subr.mxu0 0.0
    %442 = vmatpush2.xpose.msra.mxu0 %v279
    %443 = vmatprep.subr.mxu0 0.0
    %444 = vmatpush2.xpose.msra.mxu0 %v278
    %445 = vmatprep.subr.mxu0 0.0
    %446 = vmatpush2.xpose.msra.mxu0 %v277
    %447 = vmatprep.subr.mxu0 0.0
    %448 = vmatpush2.xpose.msra.mxu0 %v276
    %449 = vmatprep.subr.mxu0 0.0
    %450 = vmatpush2.xpose.msra.mxu0 %v275
    %451 = vmatprep.subr.mxu0 0.0
    %452 = vmatpush2.xpose.msra.mxu0 %v274
    %453 = vmatprep.mubr.f32.mxu0 0.0
    %454 = vmatmul.mubr.f32.gmra.mxu0 %v224
    %v455 = vpop.f32.mrf.mxu0
    %v456 = vadd.f32 %v303, %v455
    %v457 = vpop.f32.mrf.mxu0
    %v458 = vadd.f32 %v307, %v457
    %459 = vmatprep.mubr.f32.mxu0 0.0
    %460 = vmatmul.mubr.f32.gmra.mxu0 %v225
    %v461 = vpop.f32.mrf.mxu0
    %v462 = vadd.f32 %v303, %v461
    %v463 = vpop.f32.mrf.mxu0
    %v464 = vadd.f32 %v307, %v463
    %465 = vdwg.mxu0
    %466 = vst [vmem:[#allocation9] sm:$0xff] %v379
    %467 = vst [vmem:[#allocation9 + $0x8] sm:$0xff] %v381
    %468 = vst [vmem:[#allocation9 + $0x10] sm:$0xff] %v456
    %469 = vst [vmem:[#allocation9 + $0x18] sm:$0xff] %v458
    %470 = vst [vmem:[#allocation9 + $0x20] sm:$0xff] %v385
    %471 = vst [vmem:[#allocation9 + $0x28] sm:$0xff] %v387
    %472 = vst [vmem:[#allocation9 + $0x30] sm:$0xff] %v462
    %473 = vst [vmem:[#allocation9 + $0x38] sm:$0xff] %v464
    // Predicated region
    $region46: #{tpu_custom_call.1} parent=1 // pred_check
      _
    $region47: #{tpu_custom_call.1} parent=1 // pred_check_branch
      %475 = sbr.rel (0) target = $region49
    $region48: #{tpu_custom_call.1} parent=1 // pred_region
      %s477 = ssub.s32 1024, 1024
      %478 = vsyncadd [#allocation5], %s477
      %s479 = sshll.u32 [#allocation9], 4
      %s480 = int_to_ptr.vmem [resolvable:$true] %s479
      %485 = dma.vmem_to_hbm [thread:$0]  %s480, 1024, %s7, [#allocation5], 512, 512, 32
    $region49: #{tpu_custom_call.1} parent=1 // pred_fallthru
      _
    // Predicated region
    $region50: #{tpu_custom_call.1} parent=1 // pred_check
      _
    $region51: #{tpu_custom_call.1} parent=1 // pred_check_branch
      %487 = sbr.rel (0) target = $region53
    $region52: #{tpu_custom_call.1} parent=1 // pred_region
      %488 = dma.done [#allocation5], 1024
    $region53: #{tpu_custom_call.1} parent=1 // pred_fallthru
      _
    %489 = vsyncpa [#allocation4], 1
    %490 = vsyncpa [#allocation7], 1
    %491 = vsyncpa [#allocation5], 1

</llo_original>
